<compile_context>
chip_gen: v6e
topology: v6e:2x2x1
jax: 0.10.0
libtpu: 0.0.40
codegen_flags: <defaults>
</compile_context>

<pallas_src>
import math
import re
import functools

import jax
import jax.numpy as jnp
from jax import lax
from jax.experimental import pallas as pl
from jax.experimental.pallas import tpu as pltpu


# ----------------------------------------------------------------------------
# helpers
# ----------------------------------------------------------------------------
def _pick_tile(dim, target, align=1):
    """Largest t <= target with dim % t == 0 and (t % align == 0 or t == dim)."""
    target = min(target, dim)
    for t in range(target, 0, -1):
        if dim % t == 0 and (t % align == 0 or t == dim):
            return t
    return dim


def _tpu_version():
    try:
        kind = jax.devices()[0].device_kind.lower()
        m = re.search(r"v(\d+)", kind)
        return int(m.group(1)) if m else 0
    except Exception:  # pragma: no cover
        return 0


_TPU_VERSION = _tpu_version()
# v7x has only 64 MiB VMEM per TensorCore -> keep the scoped limit conservative;
# v5e/v6e have 128 MiB physical so 64 MiB scoped is safe and allows big tiles.
_VMEM_LIMIT = (48 if _TPU_VERSION >= 7 else 64) * 1024 * 1024

# Large finite negative so exp() never sees (-inf) - (-inf).
_MASK_VALUE = -0.7 * float(jnp.finfo(jnp.float32).max)


# ----------------------------------------------------------------------------
# tiled matmul + bias:  out = x @ w + b
# ----------------------------------------------------------------------------
def _matmul_bias_kernel(x_ref, w_ref, b_ref, o_ref, acc_ref):
    kk = pl.program_id(2)

    @pl.when(kk == 0)
    def _():
        acc_ref[...] = jnp.zeros_like(acc_ref)

    acc_ref[...] += jnp.dot(x_ref[...], w_ref[...],
                            preferred_element_type=jnp.float32)

    @pl.when(kk == pl.num_programs(2) - 1)
    def _():
        o_ref[...] = (acc_ref[...] + b_ref[...]).astype(o_ref.dtype)


def _matmul_bias(x2d, w, b, *, out_dtype, compute_dtype,
                 block_m=256, block_n=256, block_k=512):
    M, K = x2d.shape
    Kw, N = w.shape
    assert K == Kw
    tm = _pick_tile(M, block_m, align=8)
    tn = _pick_tile(N, block_n, align=128)
    tk = _pick_tile(K, block_k, align=128)

    # Cast matmul operands once in the wrapper (halves HBM bytes in bf16);
    # bias stays f32 and is added to the f32 accumulator.
    x2d = x2d.astype(compute_dtype)
    w = w.astype(compute_dtype)
    b2 = b.astype(jnp.float32).reshape(1, N)

    return pl.pallas_call(
        _matmul_bias_kernel,
        out_shape=jax.ShapeDtypeStruct((M, N), out_dtype),
        grid_spec=pltpu.PrefetchScalarGridSpec(
            num_scalar_prefetch=0,
            grid=(M // tm, N // tn, K // tk),
            in_specs=[
                pl.BlockSpec((tm, tk), lambda i, j, kk: (i, kk)),   # x
                pl.BlockSpec((tk, tn), lambda i, j, kk: (kk, j)),   # w
                pl.BlockSpec((1, tn), lambda i, j, kk: (0, j)),     # bias
            ],
            out_specs=pl.BlockSpec((tm, tn), lambda i, j, kk: (i, j)),
            scratch_shapes=[pltpu.VMEM((tm, tn), jnp.float32)],
        ),
        compiler_params=pltpu.CompilerParams(
            dimension_semantics=("parallel", "parallel", "arbitrary"),
            vmem_limit_bytes=_VMEM_LIMIT,
        ),
    )(x2d, w, b2)


# ----------------------------------------------------------------------------
# flash attention (causal, online softmax), reads directly from fused QKV
# ----------------------------------------------------------------------------
def _flash_attention_kernel(q_ref, k_ref, v_ref, o_ref,
                            m_sc, l_sc, acc_sc, *,
                            scale, block_q, block_k, n_head,
                            exp_dtype, approx_recip):
    # q_ref: (bq, NH, hd)   k_ref/v_ref: (bk, NH, hd)   o_ref: (bq, NH, hd)
    qi = pl.program_id(1)
    ki = pl.program_id(2)
    q_start = qi * block_q
    k_start = ki * block_k

    @pl.when(ki == 0)
    def _init():
        m_sc[...] = jnp.full(m_sc.shape, -jnp.inf, jnp.float32)
        l_sc[...] = jnp.zeros(l_sc.shape, jnp.float32)
        acc_sc[...] = jnp.zeros(acc_sc.shape, jnp.float32)

    def heads_update(apply_mask):
        if apply_mask:
            row = q_start + lax.broadcasted_iota(jnp.int32, (block_q, block_k), 0)
            col = k_start + lax.broadcasted_iota(jnp.int32, (block_q, block_k), 1)
            causal = col <= row
        for h in range(n_head):
            q_h = q_ref[:, h, :]                               # (bq, hd)
            k_h = k_ref[:, h, :]                               # (bk, hd)
            v_h = v_ref[:, h, :]                               # (bk, hd)
            # scores: contraction over head_dim, f32 accumulation on the MXU
            s = lax.dot_general(q_h, k_h, (((1,), (1,)), ((), ())),
                                preferred_element_type=jnp.float32) * scale
            if apply_mask:
                s = jnp.where(causal, s, _MASK_VALUE)
            # online softmax update (statistics in f32; exp in exp_dtype)
            m_prev = m_sc[h]                                   # (bq, 1)
            m_new = jnp.maximum(m_prev, jnp.max(s, axis=-1, keepdims=True))
            alpha = jnp.exp(m_prev - m_new)
            p = jnp.exp((s - m_new).astype(exp_dtype))         # (bq, bk)
            l_sc[h] = alpha * l_sc[h] + jnp.sum(p, axis=-1, keepdims=True,
                                                dtype=jnp.float32)
            acc_sc[h] = alpha * acc_sc[h] + lax.dot_general(
                p.astype(v_h.dtype), v_h, (((1,), (0,)), ((), ())),
                preferred_element_type=jnp.float32)
            m_sc[h] = m_new

    # Tiles intersecting the diagonal: apply the per-element causal mask.
    needs_mask = jnp.logical_and(k_start <= q_start + block_q - 1,
                                 k_start + block_k - 1 > q_start)

    @pl.when(needs_mask)
    def _masked():
        heads_update(apply_mask=True)

    # Interior tiles (strictly at/below the diagonal): no mask generation.
    @pl.when(k_start + block_k - 1 <= q_start)
    def _unmasked():
        heads_update(apply_mask=False)

    # Fully-future tiles fall through untouched (their K/V DMA is also elided
    # by the clamped index_map).  Finalization still works because m/l/acc are
    # carried in scratch across all ki steps.
    @pl.when(ki == pl.num_programs(2) - 1)
    def _finalize():
        for h in range(n_head):
            inv_l = pl.reciprocal(l_sc[h], approx=approx_recip)
            o_ref[:, h, :] = (acc_sc[h] * inv_l).astype(o_ref.dtype)


def _flash_attention(qkv, *, out_dtype, block_q=256, block_k=256):
    """qkv: (B, T, 3, NH, hd) in compute dtype -> (B, T, NH, hd)."""
    B, T, _three, NH, hd = qkv.shape
    bq = _pick_tile(T, block_q)
    bk = _pick_tile(T, block_k)
    nq = T // bq
    nk = T // bk
    scale = 1.0 / math.sqrt(hd)

    compute_is_bf16 = qkv.dtype == jnp.dtype(jnp.bfloat16)
    # bf16 exp only where the EUP supports it (v6e / v7x); v5e stays f32.
    exp_dtype = jnp.bfloat16 if (compute_is_bf16 and _TPU_VERSION >= 6) else jnp.float32
    approx_recip = compute_is_bf16

    def q_index(b, qi, ki):
        return (b, qi, 0, 0, 0)

    def kv_index_for(sel):
        # Clamp to the last KV tile this query block actually needs, so
        # fully-masked (future) tiles issue no new DMA.
        def kv_index(b, qi, ki):
            last_needed = (qi * bq + bq - 1) // bk
            return (b, jnp.minimum(ki, last_needed), sel, 0, 0)
        return kv_index

    kernel = functools.partial(
        _flash_attention_kernel,
        scale=scale, block_q=bq, block_k=bk, n_head=NH,
        exp_dtype=exp_dtype, approx_recip=approx_recip)

    return pl.pallas_call(
        kernel,
        out_shape=jax.ShapeDtypeStruct((B, T, NH, hd), out_dtype),
        grid_spec=pltpu.PrefetchScalarGridSpec(
            num_scalar_prefetch=0,
            grid=(B, nq, nk),
            in_specs=[
                pl.BlockSpec((None, bq, None, NH, hd), q_index),          # Q
                pl.BlockSpec((None, bk, None, NH, hd), kv_index_for(1)),  # K
                pl.BlockSpec((None, bk, None, NH, hd), kv_index_for(2)),  # V
            ],
            out_specs=pl.BlockSpec((None, bq, NH, hd),
                                   lambda b, qi, ki: (b, qi, 0, 0)),
            scratch_shapes=[
                pltpu.VMEM((NH, bq, 1), jnp.float32),    # running max
                pltpu.VMEM((NH, bq, 1), jnp.float32),    # running denom
                pltpu.VMEM((NH, bq, hd), jnp.float32),   # output accumulator
            ],
        ),
        compiler_params=pltpu.CompilerParams(
            dimension_semantics=("parallel", "parallel", "arbitrary"),
            vmem_limit_bytes=_VMEM_LIMIT,
        ),
    )(qkv, qkv, qkv)


# ----------------------------------------------------------------------------
# full CausalSelfAttention forward
# ----------------------------------------------------------------------------
def causal_self_attention(x, w_qkv, b_qkv, w_proj, b_proj, *, n_head,
                          compute_dtype=jnp.bfloat16,
                          block_q=256, block_k=256):
    """x: (B, T, C).  Weights in JAX convention: y = x @ W + b."""
    B, T, C = x.shape
    assert C % n_head == 0
    hd = C // n_head

    # 1) fused QKV projection -> (B*T, 3C)
    qkv = _matmul_bias(x.reshape(B * T, C), w_qkv, b_qkv,
                       out_dtype=compute_dtype, compute_dtype=compute_dtype)

    # 2) (B*T, 3C) -> (B, T, 3, NH, hd): pure reshape, no HBM data movement.
    qkv = qkv.reshape(B, T, 3, n_head, hd)

    # 3) causal flash attention reading q/k/v directly from the fused tensor;
    #    output lands in (B, T, NH, hd) so the merge below is a free reshape.
    y = _flash_attention(qkv, out_dtype=compute_dtype,
                         block_q=block_q, block_k=block_k)

    # 4) merge heads (free reshape) + output projection
    y = y.reshape(B * T, C)
    out = _matmul_bias(y, w_proj, b_proj,
                       out_dtype=x.dtype, compute_dtype=compute_dtype)
    return out.reshape(B, T, C)


# ----------------------------------------------------------------------------
# plain-JAX reference (mirrors the PyTorch forward)
# ----------------------------------------------------------------------------
def _reference(x, w_qkv, b_qkv, w_proj, b_proj, n_head):
    B, T, C = x.shape
    hd = C // n_head
    qkv = x @ w_qkv + b_qkv
    q, k, v = jnp.split(qkv, 3, axis=-1)
    q = q.reshape(B, T, n_head, hd).transpose(0, 2, 1, 3)
    k = k.reshape(B, T, n_head, hd).transpose(0, 2, 1, 3)
    v = v.reshape(B, T, n_head, hd).transpose(0, 2, 1, 3)
    att = jnp.einsum('bhtd,bhsd->bhts', q, k) / math.sqrt(hd)
    mask = jnp.tril(jnp.ones((T, T), bool))
    att = jnp.where(mask[None, None], att, -jnp.inf)
    att = jax.nn.softmax(att, axis=-1)
    y = jnp.einsum('bhts,bhsd->bhtd', att, v)
    y = y.transpose(0, 2, 1, 3).reshape(B, T, C)
    return y @ w_proj + b_proj


if __name__ == "__main__":
    # ---- config 1: small GPT-2-ish shape (single-tile path) ----
    B, T, C, NH = 2, 8, 32, 4
    key = jax.random.PRNGKey(0)
    kx, k1, k2, k3, k4 = jax.random.split(key, 5)
    x = jax.random.normal(kx, (B, T, C), dtype=jnp.float32)
    w_qkv = jax.random.normal(k1, (C, 3 * C), dtype=jnp.float32) * 0.02
    b_qkv = jax.random.normal(k2, (3 * C,), dtype=jnp.float32) * 0.02
    w_proj = jax.random.normal(k3, (C, C), dtype=jnp.float32) * 0.02
    b_proj = jax.random.normal(k4, (C,), dtype=jnp.float32) * 0.02
    ref = _reference(x, w_qkv, b_qkv, w_proj, b_proj, NH)

    out_f32 = causal_self_attention(x, w_qkv, b_qkv, w_proj, b_proj,
                                    n_head=NH, compute_dtype=jnp.float32)
    out_f32 = jax.block_until_ready(out_f32)
    assert out_f32.shape == (B, T, C)
    assert jnp.allclose(out_f32, ref, atol=1e-4, rtol=1e-4), "f32 mismatch vs reference"

    out_bf16 = causal_self_attention(x, w_qkv, b_qkv, w_proj, b_proj,
                                     n_head=NH, compute_dtype=jnp.bfloat16)
    out_bf16 = jax.block_until_ready(out_bf16)
    assert jnp.allclose(out_bf16, ref, atol=2e-2, rtol=2e-2), "bf16 mismatch vs reference"

    # ---- config 2: multi-tile path (exercises online softmax, diagonal-tile
    #      masking, interior-tile mask skip and fully-masked-tile skipping:
    #      4 query x 4 KV blocks) ----
    B2, T2, C2, NH2 = 1, 64, 64, 4
    k5, k6, k7, k8, k9 = jax.random.split(jax.random.PRNGKey(1), 5)
    x2 = jax.random.normal(k5, (B2, T2, C2), dtype=jnp.float32)
    w_qkv2 = jax.random.normal(k6, (C2, 3 * C2), dtype=jnp.float32) * 0.02
    b_qkv2 = jax.random.normal(k7, (3 * C2,), dtype=jnp.float32) * 0.02
    w_proj2 = jax.random.normal(k8, (C2, C2), dtype=jnp.float32) * 0.02
    b_proj2 = jax.random.normal(k9, (C2,), dtype=jnp.float32) * 0.02
    ref2 = _reference(x2, w_qkv2, b_qkv2, w_proj2, b_proj2, NH2)

    out2 = causal_self_attention(x2, w_qkv2, b_qkv2, w_proj2, b_proj2,
                                 n_head=NH2, compute_dtype=jnp.float32,
                                 block_q=16, block_k=16)
    out2 = jax.block_until_ready(out2)
    assert jnp.allclose(out2, ref2, atol=1e-4, rtol=1e-4), "tiled f32 mismatch vs reference"

    print("KERNEL_OK")
</pallas_src>

<mosaic_0001>
module attributes {stable_mosaic.version = 11 : i64} {
  func.func @_matmul_bias_kernel(%arg0: i32, %arg1: i32, %arg2: i32, %arg3: memref<16x32xf32, #tpu.memory_space<vmem>>, %arg4: memref<32x96xf32, #tpu.memory_space<vmem>>, %arg5: memref<1x96xf32, #tpu.memory_space<vmem>>, %arg6: memref<16x96xf32, #tpu.memory_space<vmem>>, %arg7: memref<16x96xf32, #tpu.memory_space<vmem>>) attributes {dimension_semantics = [#tpu.dimension_semantics<parallel>, #tpu.dimension_semantics<parallel>, #tpu.dimension_semantics<arbitrary>], iteration_bounds = array<i64: 1, 1, 1>, scalar_prefetch = 0 : i64, scratch_operands = 1 : i64, tpu.core_type = #tpu.core_type<tc>, window_params = [{transform_indices = @transform_0, window_bounds = array<i64: 16, 32>}, {transform_indices = @transform_1, window_bounds = array<i64: 32, 96>}, {transform_indices = @transform_2, window_bounds = array<i64: 1, 96>}, {transform_indices = @transform_3, window_bounds = array<i64: 16, 96>}]} {
    %c0_i32 = arith.constant 0 : i32
    %0 = arith.cmpi eq, %arg2, %c0_i32 : i32
    %1 = arith.extui %0 : i1 to i32
    %c0_i32_0 = arith.constant 0 : i32
    %2 = arith.cmpi ne, %1, %c0_i32_0 : i32
    scf.if %2 {
      %cst_10 = arith.constant 0.000000e+00 : f32
      %12 = vector.broadcast %cst_10 : f32 to vector<16x96xf32>
      %c0_11 = arith.constant 0 : index
      %c0_12 = arith.constant 0 : index
      %13 = vector.load %arg7[%c0_11, %c0_12] : memref<16x96xf32, #tpu.memory_space<vmem>>, vector<16x96xf32>
      tpu.vector_store %arg7[%c0_11, %c0_12], %12 {strides = array<i32>} : memref<16x96xf32, #tpu.memory_space<vmem>>, vector<16x96xf32>,
    } else {
    }
    %c0 = arith.constant 0 : index
    %c0_1 = arith.constant 0 : index
    %3 = vector.load %arg7[%c0, %c0_1] : memref<16x96xf32, #tpu.memory_space<vmem>>, vector<16x96xf32>
    %c0_2 = arith.constant 0 : index
    %c0_3 = arith.constant 0 : index
    %4 = vector.load %arg3[%c0_2, %c0_3] : memref<16x32xf32, #tpu.memory_space<vmem>>, vector<16x32xf32>
    %c0_4 = arith.constant 0 : index
    %c0_5 = arith.constant 0 : index
    %5 = vector.load %arg4[%c0_4, %c0_5] : memref<32x96xf32, #tpu.memory_space<vmem>>, vector<32x96xf32>
    %cst = arith.constant dense<0.000000e+00> : vector<16x96xf32>
    %6 = tpu.matmul %4, %5, %cst {dimension_numbers = #tpu.dot_dimension_numbers<[1], [0], [0], [1], [0, 0, 1, 1], [], []>} : vector<16x32xf32>, vector<32x96xf32>, vector<16x96xf32> -> vector<16x96xf32>
    %7 = arith.addf %3, %6 : vector<16x96xf32>
    %c0_6 = arith.constant 0 : index
    %c0_7 = arith.constant 0 : index
    %8 = vector.load %arg7[%c0_6, %c0_7] : memref<16x96xf32, #tpu.memory_space<vmem>>, vector<16x96xf32>
    tpu.vector_store %arg7[%c0_6, %c0_7], %7 {strides = array<i32>} : memref<16x96xf32, #tpu.memory_space<vmem>>, vector<16x96xf32>,
    %c0_i32_8 = arith.constant 0 : i32
    %9 = arith.cmpi eq, %arg2, %c0_i32_8 : i32
    %10 = arith.extui %9 : i1 to i32
    %c0_i32_9 = arith.constant 0 : i32
    %11 = arith.cmpi ne, %10, %c0_i32_9 : i32
    scf.if %11 {
      %c0_10 = arith.constant 0 : index
      %c0_11 = arith.constant 0 : index
      %12 = vector.load %arg7[%c0_10, %c0_11] : memref<16x96xf32, #tpu.memory_space<vmem>>, vector<16x96xf32>
      %c0_12 = arith.constant 0 : index
      %c0_13 = arith.constant 0 : index
      %13 = vector.load %arg5[%c0_12, %c0_13] : memref<1x96xf32, #tpu.memory_space<vmem>>, vector<1x96xf32>
      %14 = vector.broadcast %13 : vector<1x96xf32> to vector<16x96xf32>
      %15 = arith.addf %12, %14 : vector<16x96xf32>
      %c0_14 = arith.constant 0 : index
      %c0_15 = arith.constant 0 : index
      %16 = vector.load %arg6[%c0_14, %c0_15] : memref<16x96xf32, #tpu.memory_space<vmem>>, vector<16x96xf32>
      tpu.vector_store %arg6[%c0_14, %c0_15], %15 {strides = array<i32>} : memref<16x96xf32, #tpu.memory_space<vmem>>, vector<16x96xf32>,
    } else {
    }
    return
  }
  func.func @transform_0(%arg0: i32, %arg1: i32, %arg2: i32) -> (i32, i32) {
    %c0_i32 = arith.constant 0 : i32
    return %arg0, %arg2 : i32, i32
  }
  func.func @transform_1(%arg0: i32, %arg1: i32, %arg2: i32) -> (i32, i32) {
    %c0_i32 = arith.constant 0 : i32
    return %arg2, %arg1 : i32, i32
  }
  func.func @transform_2(%arg0: i32, %arg1: i32, %arg2: i32) -> (i32, i32) {
    %c0_i32 = arith.constant 0 : i32
    %c0_i32_0 = arith.constant 0 : i32
    return %c0_i32, %arg1 : i32, i32
  }
  func.func @transform_3(%arg0: i32, %arg1: i32, %arg2: i32) -> (i32, i32) {
    %c0_i32 = arith.constant 0 : i32
    return %arg0, %arg1 : i32, i32
  }
}

</mosaic_0001>

<llo_original>
// kernel: tpu_custom_call.1
$region0: #{tpu_custom_call.1}
  #allocation0 [shape = 'u32[]', space=smem, size = 0x4, offset = 0x4, fixed_abs, tag = 'smem constant byte address 0x4 - core index']
  #allocation1 [shape = 'u32[144,128]{1,0:T(1,128)}', space=vmem, size = 0x12000, scoped, tag = 'internal scratch']
  #allocation2 [shape = 'f32[16,96]{1,0:T(8,128)}', space=vmem, size = 0x2000, scoped, tag = 'scratch operand']
  %s0 = inlined_call_operand.hbm [shape: f32[16,32], index: 0, kind: input, shape index: {}]
  %s1 = inlined_call_operand.hbm [shape: f32[32,96], index: 1, kind: input, shape index: {}]
  %s2 = inlined_call_operand.vmem [shape: f32[1,96], index: 2, kind: input, shape index: {}]
  %s3 = inlined_call_operand.hbm [shape: f32[16,96], index: 3, kind: output, shape index: {}]
  %s4 = sld [smem:[#allocation0]]
  $region38: #{tpu_custom_call.1} parent=0
    _
  %s6 = ssub.s32 1, %s4
  %s7 = scalar_select 0, %s6, %s4
  $region1: #{tpu_custom_call.1} parent=0
    #allocation3 [shape = 'u8[8192]{0}', space=vmem, size = 0x2000, scoped, tag = 'input window, operand 0, single buffered']
    #allocation4 [shape = 's32[1]{0}', space=sflag, size = 0x4, scoped, tag = 'scoped memory for tpu_custom_call.1']
    #allocation5 [shape = 's32[1]{0}', space=sflag, size = 0x4, scoped, tag = 'scoped memory for tpu_custom_call.1']
    #allocation6 [shape = 'u8[16384]{0}', space=vmem, size = 0x4000, scoped, tag = 'input window, operand 1, single buffered']
    #allocation7 [shape = 's32[1]{0}', space=sflag, size = 0x4, scoped, tag = 'scoped memory for tpu_custom_call.1']
    #allocation8 [shape = 'u8[8192]{0}', space=vmem, size = 0x2000, scoped, tag = 'output window, operand 0, single buffered']
    %8 = vsyncpa [#allocation4], 0
    %9 = vsyncpa [#allocation7], 0
    %10 = vsyncpa [#allocation5], 0
    // Predicated region
    $region2: #{tpu_custom_call.1} parent=1 // pred_check
      _
    $region3: #{tpu_custom_call.1} parent=1 // pred_check_branch
      %12 = sbr.rel (0) target = $region5
    $region4: #{tpu_custom_call.1} parent=1 // pred_region
      %s14 = ssub.s32 256, 256
      %15 = vsyncadd [#allocation4], %s14
      %s16 = sshll.u32 [#allocation3], 4
      %s17 = int_to_ptr.vmem [resolvable:$true] %s16
      %22 = dma.hbm_to_vmem [thread:$0]  %s0, 256, %s17, [#allocation4], 128, 128, 8
    $region5: #{tpu_custom_call.1} parent=1 // pred_fallthru
      _
    // Predicated region
    $region6: #{tpu_custom_call.1} parent=1 // pred_check
      _
    $region7: #{tpu_custom_call.1} parent=1 // pred_check_branch
      %24 = sbr.rel (0) target = $region9
    $region8: #{tpu_custom_call.1} parent=1 // pred_region
      %s26 = ssub.s32 512, 512
      %27 = vsyncadd [#allocation7], %s26
      %s28 = sshll.u32 [#allocation6], 4
      %s29 = int_to_ptr.vmem [resolvable:$true] %s28
      %34 = dma.hbm_to_vmem [thread:$0]  %s1, 512, %s29, [#allocation7], 128, 128, 8
    $region9: #{tpu_custom_call.1} parent=1 // pred_fallthru
      _
    // Predicated region
    $region10: #{tpu_custom_call.1} parent=1 // pred_check
      _
    $region11: #{tpu_custom_call.1} parent=1 // pred_check_branch
      %36 = sbr.rel (0) target = $region13
    $region12: #{tpu_custom_call.1} parent=1 // pred_region
      _
    $region13: #{tpu_custom_call.1} parent=1 // pred_fallthru
      _
    // Predicated region
    $region14: #{tpu_custom_call.1} parent=1 // pred_check
      _
    $region15: #{tpu_custom_call.1} parent=1 // pred_check_branch
      %38 = sbr.rel (0) target = $region17
    $region16: #{tpu_custom_call.1} parent=1 // pred_region
      %39 = dma.done [#allocation4], 256
    $region17: #{tpu_custom_call.1} parent=1 // pred_fallthru
      _
    // Predicated region
    $region18: #{tpu_custom_call.1} parent=1 // pred_check
      _
    $region19: #{tpu_custom_call.1} parent=1 // pred_check_branch
      %41 = sbr.rel (0) target = $region21
    $region20: #{tpu_custom_call.1} parent=1 // pred_region
      %42 = dma.done [#allocation7], 512
    $region21: #{tpu_custom_call.1} parent=1 // pred_fallthru
      _
    %p43 = scmp.eq.s32.totalorder 0, 0
    // Predicated region
    $region22: #{tpu_custom_call.1} parent=1 // pred_check
      %p44 = pneg %p43
    $region23: #{tpu_custom_call.1} parent=1 // pred_check_branch
      %46 = sbr.rel (%p44) target = $region25
    $region24: #{tpu_custom_call.1} parent=1 // pred_region
      %vm47 = vcmask 785408
      %48 = vst.msk [vmem:[#allocation2] sm:$0xff] %vm47, 0.0
      %49 = vst.msk [vmem:[#allocation2 + $0x8] sm:$0xff] %vm47, 0.0
    $region25: #{tpu_custom_call.1} parent=1 // pred_fallthru
      _
    %v50 = vld [vmem:[#allocation2] sm:$0xff]
    %v51 = vld [vmem:[#allocation2 + $0x8] sm:$0xff]
    %v52 = vld [vmem:[#allocation3] sm:$0xff]
    %v53 = vld [vmem:[#allocation3 + $0x8] sm:$0xff]
    %v54 = vld [vmem:[#allocation6] sm:$0xff]
    %v55 = vld [vmem:[#allocation6 + $0x8] sm:$0xff]
    %v56 = vld [vmem:[#allocation6 + $0x10] sm:$0xff]
    %v57 = vld [vmem:[#allocation6 + $0x18] sm:$0xff]
    %vm58 = vcmask 261120
    %v60 = vsel %vm58, %v52, 0
    %v63 = vsel %vm58, %v53, 0
    %65 = vmatprep.subr.mxu0 0.0
    %66 = vmatpush1.msra.mxu0 0.0
    %67 = vmatprep.subr.mxu0 0.0
    %68 = vmatpush1.msra.mxu0 0.0
    %69 = vmatprep.subr.mxu0 0.0
    %70 = vmatpush1.msra.mxu0 0.0
    %71 = vmatprep.subr.mxu0 0.0
    %72 = vmatpush1.msra.mxu0 0.0
    %73 = vmatprep.subr.mxu0 0.0
    %74 = vmatpush1.msra.mxu0 0.0
    %75 = vmatprep.subr.mxu0 0.0
    %76 = vmatpush1.msra.mxu0 0.0
    %77 = vmatprep.subr.mxu0 0.0
    %78 = vmatpush1.msra.mxu0 0.0
    %79 = vmatprep.subr.mxu0 0.0
    %80 = vmatpush1.msra.mxu0 0.0
    %81 = vmatprep.subr.mxu0 0.0
    %82 = vmatpush1.msra.mxu0 0.0
    %83 = vmatprep.subr.mxu0 0.0
    %84 = vmatpush1.msra.mxu0 0.0
    %85 = vmatprep.subr.mxu0 0.0
    %86 = vmatpush1.msra.mxu0 0.0
    %87 = vmatprep.subr.mxu0 0.0
    %88 = vmatpush1.msra.mxu0 0.0
    %89 = vmatprep.subr.mxu0 0.0
    %90 = vmatpush1.msra.mxu0 %v57
    %91 = vmatprep.subr.mxu0 0.0
    %92 = vmatpush1.msra.mxu0 %v56
    %93 = vmatprep.subr.mxu0 0.0
    %94 = vmatpush1.msra.mxu0 %v55
    %95 = vmatprep.subr.mxu0 0.0
    %96 = vmatpush1.msra.mxu0 %v54
    %97 = vmatprep.subr.mxu0 0.0
    %98 = vmatpush2.msra.mxu0 0.0
    %99 = vmatprep.subr.mxu0 0.0
    %100 = vmatpush2.msra.mxu0 0.0
    %101 = vmatprep.subr.mxu0 0.0
    %102 = vmatpush2.msra.mxu0 0.0
    %103 = vmatprep.subr.mxu0 0.0
    %104 = vmatpush2.msra.mxu0 0.0
    %105 = vmatprep.subr.mxu0 0.0
    %106 = vmatpush2.msra.mxu0 0.0
    %107 = vmatprep.subr.mxu0 0.0
    %108 = vmatpush2.msra.mxu0 0.0
    %109 = vmatprep.subr.mxu0 0.0
    %110 = vmatpush2.msra.mxu0 0.0
    %111 = vmatprep.subr.mxu0 0.0
    %112 = vmatpush2.msra.mxu0 0.0
    %113 = vmatprep.subr.mxu0 0.0
    %114 = vmatpush2.msra.mxu0 0.0
    %115 = vmatprep.subr.mxu0 0.0
    %116 = vmatpush2.msra.mxu0 0.0
    %117 = vmatprep.subr.mxu0 0.0
    %118 = vmatpush2.msra.mxu0 0.0
    %119 = vmatprep.subr.mxu0 0.0
    %120 = vmatpush2.msra.mxu0 0.0
    %121 = vmatprep.subr.mxu0 0.0
    %122 = vmatpush2.msra.mxu0 0.0
    %123 = vmatprep.subr.mxu0 0.0
    %124 = vmatpush2.msra.mxu0 0.0
    %125 = vmatprep.subr.mxu0 0.0
    %126 = vmatpush2.msra.mxu0 0.0
    %127 = vmatprep.subr.mxu0 0.0
    %128 = vmatpush2.msra.mxu0 0.0
    %129 = vmatprep.mubr.f32.mxu0 0.0
    %130 = vmatmul.mubr.f32.gmra.mxu0 %v60
    %v131 = vpop.f32.mrf.mxu0
    %v132 = vadd.f32 0.0, %v131
    %v133 = vpop.f32.mrf.mxu0
    %134 = vmatprep.mubr.f32.mxu0 0.0
    %135 = vmatmul.mubr.f32.gmra.mxu0 %v63
    %v136 = vpop.f32.mrf.mxu0
    %v137 = vadd.f32 0.0, %v136
    %v138 = vpop.f32.mrf.mxu0
    %139 = vdwg.mxu0
    %v140 = vadd.f32 %v50, %v132
    %v141 = vadd.f32 %v51, %v137
    %vm142 = vcmask 785408
    %143 = vst.msk [vmem:[#allocation2] sm:$0xff] %vm142, %v140
    %144 = vst.msk [vmem:[#allocation2 + $0x8] sm:$0xff] %vm142, %v141
    // Predicated region
    $region26: #{tpu_custom_call.1} parent=1 // pred_check
      %p145 = pneg %p43
    $region27: #{tpu_custom_call.1} parent=1 // pred_check_branch
      %147 = sbr.rel (%p145) target = $region29
    $region28: #{tpu_custom_call.1} parent=1 // pred_region
      %v148 = vld [vmem:[#allocation2] sm:$0xff]
      %v149 = vld [vmem:[#allocation2 + $0x8] sm:$0xff]
      %v150 = vld [vmem:[%s2] sm:$0x1]
      %v152 = vlaneseq
      %v153 = vshrl.u32 %v152, 7
      %v154 = vsub.s32 0, %v153
      %v155 = vrot.slane %v150, %v154
      %v157 = vadd.f32 %v148, %v155
      %v158 = vadd.f32 %v149, %v155
      %159 = vst.msk [vmem:[#allocation8] sm:$0xff] %vm142, %v157
      %160 = vst.msk [vmem:[#allocation8 + $0x8] sm:$0xff] %vm142, %v158
    $region29: #{tpu_custom_call.1} parent=1 // pred_fallthru
      _
    // Predicated region
    $region30: #{tpu_custom_call.1} parent=1 // pred_check
      _
    $region31: #{tpu_custom_call.1} parent=1 // pred_check_branch
      %162 = sbr.rel (0) target = $region33
    $region32: #{tpu_custom_call.1} parent=1 // pred_region
      %s164 = ssub.s32 256, 256
      %165 = vsyncadd [#allocation5], %s164
      %s166 = sshll.u32 [#allocation8], 4
      %s167 = int_to_ptr.vmem [resolvable:$true] %s166
      %172 = dma.vmem_to_hbm [thread:$0]  %s167, 256, %s3, [#allocation5], 128, 128, 8
    $region33: #{tpu_custom_call.1} parent=1 // pred_fallthru
      _
    // Predicated region
    $region34: #{tpu_custom_call.1} parent=1 // pred_check
      _
    $region35: #{tpu_custom_call.1} parent=1 // pred_check_branch
      %174 = sbr.rel (0) target = $region37
    $region36: #{tpu_custom_call.1} parent=1 // pred_region
      %175 = dma.done [#allocation5], 256
    $region37: #{tpu_custom_call.1} parent=1 // pred_fallthru
      _
    %176 = vsyncpa [#allocation4], 1
    %177 = vsyncpa [#allocation7], 1
    %178 = vsyncpa [#allocation5], 1

</llo_original>
